<compile_context>
chip_gen: v7x
topology: tpu7x:2x2x1
jax: 0.10.0
libtpu: 0.0.40
codegen_flags: <defaults>
</compile_context>

<pallas_src>
import functools

import jax
import jax.numpy as jnp
from jax.experimental import pallas as pl
from jax.experimental.pallas import tpu as pltpu

# Fixed (non-trainable) Sobel weights, mirroring the PyTorch module:
GX_W = ((1.0, 0.0, -1.0), (2.0, 0.0, -2.0), (1.0, 0.0, -1.0))
GY_W = ((1.0, 2.0, 1.0), (0.0, 0.0, 0.0), (-1.0, -2.0, -1.0))


def _shift_cols(a, shift):
    """Column shift with zero fill (the 3x3 conv's padding=1 at left/right edges).

    shift=+1: out[:, c] = a[:, c-1]  (out[:, 0]   = 0)
    shift=-1: out[:, c] = a[:, c+1]  (out[:, W-1] = 0)
    """
    th, w = a.shape
    if w % 128 == 0:
        # Lane-aligned width: XLU rotate (separate issue slot from the VPU adds)
        # plus a mask of the single wrapped edge column.
        col = jax.lax.broadcasted_iota(jnp.int32, (th, w), 1)
        if shift == 1:
            return jnp.where(col > 0, pltpu.roll(a, 1, 1), 0.0)
        return jnp.where(col < w - 1, pltpu.roll(a, w - 1, 1), 0.0)
    # Small / unaligned width: explicit zero column + static slices.
    z = jnp.zeros((th, 1), a.dtype)
    if shift == 1:
        return jnp.concatenate([z, a[:, : w - 1]], axis=1)
    return jnp.concatenate([a[:, 1:], z], axis=1)


def _gray_row(ref, row):
    """Grayscale of one (static) row of a (1, 3, HB, W) halo block -> (1, W) f32."""
    r0 = ref[0, 0].astype(jnp.float32)
    r1 = ref[0, 1].astype(jnp.float32)
    r2 = ref[0, 2].astype(jnp.float32)
    return (r0[row:row + 1] + r1[row:row + 1] + r2[row:row + 1]) * jnp.float32(1.0 / 3.0)


def _sobel_kernel(x_ref, top_ref, bot_ref, o_ref, *, top_row, bot_row):
    # x_ref  : (1, 3, TILE_H, W)  current image tile
    # top_ref: (1, 3, HB, W)      block containing the row just above the tile
    # bot_ref: (1, 3, HB, W)      block containing the row just below the tile
    # o_ref  : (1, 2, TILE_H, W)  (Gx, Gy)
    f32 = jnp.float32
    i = pl.program_id(1)
    last = pl.num_programs(1) - 1

    # Grayscale 1x1 conv (all weights 1/3, bias 0), in f32.
    g = (x_ref[0, 0].astype(f32) + x_ref[0, 1].astype(f32)
         + x_ref[0, 2].astype(f32)) * f32(1.0 / 3.0)
    th = g.shape[0]

    # Halo rows; zeroed at the true top/bottom image border (padding=1 semantics).
    gt = jnp.where(i == 0, f32(0.0), _gray_row(top_ref, top_row))
    gb = jnp.where(i == last, f32(0.0), _gray_row(bot_ref, bot_row))

    # Row (sublane) taps, halo-aware.
    g_up = jnp.concatenate([gt, g[: th - 1]], axis=0)   # g[r-1, :]
    g_dn = jnp.concatenate([g[1:], gb], axis=0)         # g[r+1, :]

    # Separable 3x3 Sobel:
    #   Gx(r, c) = s(r, c-1) - s(r, c+1),            s = g[r-1] + 2 g[r] + g[r+1]
    #   Gy(r, c) = d(r, c-1) + 2 d(r, c) + d(r, c+1), d = g[r-1] - g[r+1]
    s = g_up + 2.0 * g + g_dn
    d = g_up - g_dn

    gx = _shift_cols(s, +1) - _shift_cols(s, -1)
    gy = _shift_cols(d, +1) + 2.0 * d + _shift_cols(d, -1)

    o_ref[0, 0] = gx.astype(o_ref.dtype)
    o_ref[0, 1] = gy.astype(o_ref.dtype)


def _pick_tile_h(H, W, itemsize, budget_bytes=16 * 1024 * 1024):
    """Largest multiple-of-8 divisor of H whose double-buffered working set
    (3 input + 2 output planes) stays under budget_bytes."""
    if H % 8 != 0:
        return H                       # single-tile fallback (no halo tiling)
    max_th = max(8, budget_bytes // (2 * 5 * max(W, 1) * itemsize))
    cands = [th for th in range(8, H + 1, 8) if H % th == 0 and th <= max_th]
    return max(cands) if cands else H


def sobel_filter(x, tile_h=None):
    """x: [B, 3, H, W] -> [B, 2, H, W] (channel 0 = Gx, channel 1 = Gy)."""
    B, C, H, W = x.shape
    assert C == 3, "SobelFilter expects 3 input channels (RGB)"
    itemsize = jnp.dtype(x.dtype).itemsize

    if tile_h is None:
        tile_h = _pick_tile_h(H, W, itemsize)
    # H-tiling with an 8-row-aligned halo requires tile_h | H and 8 | tile_h, H.
    if H % tile_h != 0 or (H // tile_h > 1 and (tile_h % 8 or H % 8)):
        tile_h = H                     # safe fallback: single tile along H
    n_h = H // tile_h
    halo_aligned = (H % 8 == 0) and (tile_h % 8 == 0)

    if halo_aligned:
        # Halo block = the 8-row block containing the row just above / below the tile.
        hb = 8
        nb = tile_h // 8
        n_hb = H // 8
        top_row, bot_row = 7, 0
        top_map = lambda b, i: (b, 0, jnp.maximum(i * nb - 1, 0), 0)
        bot_map = lambda b, i: (b, 0, jnp.minimum((i + 1) * nb, n_hb - 1), 0)
    else:
        # Single tile along H (H not a multiple of 8): halo inputs are unused
        # (fully masked in-kernel); point them at block 0 with a legal full-H shape.
        hb = H
        top_row, bot_row = 0, 0
        top_map = lambda b, i: (b, 0, 0, 0)
        bot_map = lambda b, i: (b, 0, 0, 0)

    kernel = functools.partial(_sobel_kernel, top_row=top_row, bot_row=bot_row)
    return pl.pallas_call(
        kernel,
        out_shape=jax.ShapeDtypeStruct((B, 2, H, W), x.dtype),
        grid=(B, n_h),
        in_specs=[
            pl.BlockSpec((1, 3, tile_h, W), lambda b, i: (b, 0, i, 0)),
            pl.BlockSpec((1, 3, hb, W), top_map),
            pl.BlockSpec((1, 3, hb, W), bot_map),
        ],
        out_specs=pl.BlockSpec((1, 2, tile_h, W), lambda b, i: (b, 0, i, 0)),
        compiler_params=pltpu.CompilerParams(
            dimension_semantics=("parallel", "parallel"),
            vmem_limit_bytes=32 * 1024 * 1024,
        ),
    )(x, x, x)


def _reference(x):
    """Pure-JAX reference: same math via lax.conv_general_dilated."""
    gray_w = jnp.full((1, 3, 1, 1), 1.0 / 3.0, jnp.float32)
    sobel_w = jnp.stack([jnp.array(GX_W, jnp.float32),
                         jnp.array(GY_W, jnp.float32)])[:, None, :, :]   # (2,1,3,3)
    xf = x.astype(jnp.float32)
    gray = jax.lax.conv_general_dilated(xf, gray_w, (1, 1), "VALID",
                                        dimension_numbers=("NCHW", "OIHW", "NCHW"))
    out = jax.lax.conv_general_dilated(gray, sobel_w, (1, 1), ((1, 1), (1, 1)),
                                       dimension_numbers=("NCHW", "OIHW", "NCHW"))
    return out.astype(x.dtype)


if __name__ == "__main__":
    key = jax.random.PRNGKey(0)
    k1, k2, k3 = jax.random.split(key, 3)

    # Multi-tile H: exercises interior halo rows + true-border masking.
    x1 = jax.random.normal(k1, (2, 3, 16, 16), dtype=jnp.float32)
    o1 = jax.block_until_ready(sobel_filter(x1, tile_h=8))
    assert o1.shape == (2, 2, 16, 16)
    assert jnp.allclose(o1, _reference(x1), atol=1e-5, rtol=1e-5)

    # Single-tile fallback (H not a multiple of 8, odd W).
    x2 = jax.random.normal(k2, (1, 3, 12, 20), dtype=jnp.float32)
    o2 = jax.block_until_ready(sobel_filter(x2))
    assert jnp.allclose(o2, _reference(x2), atol=1e-5, rtol=1e-5)

    # Lane-aligned width (W % 128 == 0): exercises the pltpu.roll column-tap path.
    x3 = jax.random.normal(k3, (2, 3, 16, 128), dtype=jnp.float32)
    o3 = jax.block_until_ready(sobel_filter(x3, tile_h=8))
    assert jnp.allclose(o3, _reference(x3), atol=1e-5, rtol=1e-5)

    print("KERNEL_OK")
</pallas_src>

<mosaic_0001>
module attributes {stable_mosaic.version = 11 : i64} {
  func.func @_sobel_kernel(%arg0: i32, %arg1: i32, %arg2: memref<1x3x8x16xf32, #tpu.memory_space<vmem>>, %arg3: memref<1x3x8x16xf32, #tpu.memory_space<vmem>>, %arg4: memref<1x3x8x16xf32, #tpu.memory_space<vmem>>, %arg5: memref<1x2x8x16xf32, #tpu.memory_space<vmem>>) attributes {dimension_semantics = [#tpu.dimension_semantics<parallel>, #tpu.dimension_semantics<parallel>], iteration_bounds = array<i64: 2, 2>, scalar_prefetch = 0 : i64, scratch_operands = 0 : i64, tpu.core_type = #tpu.core_type<tc>, window_params = [{transform_indices = @transform_0, window_bounds = array<i64: 1, 3, 8, 16>}, {transform_indices = @transform_1, window_bounds = array<i64: 1, 3, 8, 16>}, {transform_indices = @transform_2, window_bounds = array<i64: 1, 3, 8, 16>}, {transform_indices = @transform_3, window_bounds = array<i64: 1, 2, 8, 16>}]} {
    %c0 = arith.constant 0 : index
    %c0_0 = arith.constant 0 : index
    %c0_1 = arith.constant 0 : index
    %c0_2 = arith.constant 0 : index
    %0 = vector.load %arg2[%c0, %c0_0, %c0_1, %c0_2] : memref<1x3x8x16xf32, #tpu.memory_space<vmem>>, vector<1x1x8x16xf32>
    %1 = vector.shape_cast %0 : vector<1x1x8x16xf32> to vector<8x16xf32>
    %c0_3 = arith.constant 0 : index
    %c1 = arith.constant 1 : index
    %c0_4 = arith.constant 0 : index
    %c0_5 = arith.constant 0 : index
    %2 = vector.load %arg2[%c0_3, %c1, %c0_4, %c0_5] : memref<1x3x8x16xf32, #tpu.memory_space<vmem>>, vector<1x1x8x16xf32>
    %3 = vector.shape_cast %2 : vector<1x1x8x16xf32> to vector<8x16xf32>
    %4 = arith.addf %1, %3 : vector<8x16xf32>
    %c0_6 = arith.constant 0 : index
    %c2 = arith.constant 2 : index
    %c0_7 = arith.constant 0 : index
    %c0_8 = arith.constant 0 : index
    %5 = vector.load %arg2[%c0_6, %c2, %c0_7, %c0_8] : memref<1x3x8x16xf32, #tpu.memory_space<vmem>>, vector<1x1x8x16xf32>
    %6 = vector.shape_cast %5 : vector<1x1x8x16xf32> to vector<8x16xf32>
    %7 = arith.addf %4, %6 : vector<8x16xf32>
    %cst = arith.constant 0.333333343 : f32
    %8 = vector.broadcast %cst : f32 to vector<8x16xf32>
    %9 = arith.mulf %7, %8 : vector<8x16xf32>
    %c0_i32 = arith.constant 0 : i32
    %10 = arith.cmpi eq, %arg1, %c0_i32 : i32
    %c0_9 = arith.constant 0 : index
    %c0_10 = arith.constant 0 : index
    %c0_11 = arith.constant 0 : index
    %c0_12 = arith.constant 0 : index
    %11 = vector.load %arg3[%c0_9, %c0_10, %c0_11, %c0_12] : memref<1x3x8x16xf32, #tpu.memory_space<vmem>>, vector<1x1x8x16xf32>
    %12 = vector.shape_cast %11 : vector<1x1x8x16xf32> to vector<8x16xf32>
    %c0_13 = arith.constant 0 : index
    %c1_14 = arith.constant 1 : index
    %c0_15 = arith.constant 0 : index
    %c0_16 = arith.constant 0 : index
    %13 = vector.load %arg3[%c0_13, %c1_14, %c0_15, %c0_16] : memref<1x3x8x16xf32, #tpu.memory_space<vmem>>, vector<1x1x8x16xf32>
    %14 = vector.shape_cast %13 : vector<1x1x8x16xf32> to vector<8x16xf32>
    %c0_17 = arith.constant 0 : index
    %c2_18 = arith.constant 2 : index
    %c0_19 = arith.constant 0 : index
    %c0_20 = arith.constant 0 : index
    %15 = vector.load %arg3[%c0_17, %c2_18, %c0_19, %c0_20] : memref<1x3x8x16xf32, #tpu.memory_space<vmem>>, vector<1x1x8x16xf32>
    %16 = vector.shape_cast %15 : vector<1x1x8x16xf32> to vector<8x16xf32>
    %17 = vector.extract_strided_slice %12 {offsets = [7, 0], sizes = [1, 16], strides = [1, 1]} : vector<8x16xf32> to vector<1x16xf32>
    %18 = vector.extract_strided_slice %14 {offsets = [7, 0], sizes = [1, 16], strides = [1, 1]} : vector<8x16xf32> to vector<1x16xf32>
    %19 = arith.addf %17, %18 : vector<1x16xf32>
    %20 = vector.extract_strided_slice %16 {offsets = [7, 0], sizes = [1, 16], strides = [1, 1]} : vector<8x16xf32> to vector<1x16xf32>
    %21 = arith.addf %19, %20 : vector<1x16xf32>
    %cst_21 = arith.constant 0.333333343 : f32
    %22 = vector.broadcast %cst_21 : f32 to vector<1x16xf32>
    %23 = arith.mulf %21, %22 : vector<1x16xf32>
    %cst_22 = arith.constant 0.000000e+00 : f32
    %24 = vector.broadcast %cst_22 : f32 to vector<1x16xf32>
    %25 = arith.select %10, %24, %23 : vector<1x16xf32>
    %c1_i32 = arith.constant 1 : i32
    %26 = arith.cmpi eq, %arg1, %c1_i32 : i32
    %c0_23 = arith.constant 0 : index
    %c0_24 = arith.constant 0 : index
    %c0_25 = arith.constant 0 : index
    %c0_26 = arith.constant 0 : index
    %27 = vector.load %arg4[%c0_23, %c0_24, %c0_25, %c0_26] : memref<1x3x8x16xf32, #tpu.memory_space<vmem>>, vector<1x1x8x16xf32>
    %28 = vector.shape_cast %27 : vector<1x1x8x16xf32> to vector<8x16xf32>
    %c0_27 = arith.constant 0 : index
    %c1_28 = arith.constant 1 : index
    %c0_29 = arith.constant 0 : index
    %c0_30 = arith.constant 0 : index
    %29 = vector.load %arg4[%c0_27, %c1_28, %c0_29, %c0_30] : memref<1x3x8x16xf32, #tpu.memory_space<vmem>>, vector<1x1x8x16xf32>
    %30 = vector.shape_cast %29 : vector<1x1x8x16xf32> to vector<8x16xf32>
    %c0_31 = arith.constant 0 : index
    %c2_32 = arith.constant 2 : index
    %c0_33 = arith.constant 0 : index
    %c0_34 = arith.constant 0 : index
    %31 = vector.load %arg4[%c0_31, %c2_32, %c0_33, %c0_34] : memref<1x3x8x16xf32, #tpu.memory_space<vmem>>, vector<1x1x8x16xf32>
    %32 = vector.shape_cast %31 : vector<1x1x8x16xf32> to vector<8x16xf32>
    %33 = vector.extract_strided_slice %28 {offsets = [0, 0], sizes = [1, 16], strides = [1, 1]} : vector<8x16xf32> to vector<1x16xf32>
    %34 = vector.extract_strided_slice %30 {offsets = [0, 0], sizes = [1, 16], strides = [1, 1]} : vector<8x16xf32> to vector<1x16xf32>
    %35 = arith.addf %33, %34 : vector<1x16xf32>
    %36 = vector.extract_strided_slice %32 {offsets = [0, 0], sizes = [1, 16], strides = [1, 1]} : vector<8x16xf32> to vector<1x16xf32>
    %37 = arith.addf %35, %36 : vector<1x16xf32>
    %cst_35 = arith.constant 0.333333343 : f32
    %38 = vector.broadcast %cst_35 : f32 to vector<1x16xf32>
    %39 = arith.mulf %37, %38 : vector<1x16xf32>
    %cst_36 = arith.constant 0.000000e+00 : f32
    %40 = vector.broadcast %cst_36 : f32 to vector<1x16xf32>
    %41 = arith.select %26, %40, %39 : vector<1x16xf32>
    %42 = vector.extract_strided_slice %9 {offsets = [0, 0], sizes = [7, 16], strides = [1, 1]} : vector<8x16xf32> to vector<7x16xf32>
    %43 = tpu.concatenate %25, %42 in 0 : vector<1x16xf32>, vector<7x16xf32> -> vector<8x16xf32>
    %44 = vector.extract_strided_slice %9 {offsets = [1, 0], sizes = [7, 16], strides = [1, 1]} : vector<8x16xf32> to vector<7x16xf32>
    %45 = tpu.concatenate %44, %41 in 0 : vector<7x16xf32>, vector<1x16xf32> -> vector<8x16xf32>
    %cst_37 = arith.constant 2.000000e+00 : f32
    %46 = vector.broadcast %cst_37 : f32 to vector<8x16xf32>
    %47 = arith.mulf %46, %9 : vector<8x16xf32>
    %48 = arith.addf %43, %47 : vector<8x16xf32>
    %49 = arith.addf %48, %45 : vector<8x16xf32>
    %50 = arith.subf %43, %45 : vector<8x16xf32>
    %cst_38 = arith.constant 0.000000e+00 : f32
    %51 = vector.broadcast %cst_38 : f32 to vector<8x1xf32>
    %52 = vector.extract_strided_slice %49 {offsets = [0, 0], sizes = [8, 15], strides = [1, 1]} : vector<8x16xf32> to vector<8x15xf32>
    %53 = tpu.concatenate %51, %52 in 1 : vector<8x1xf32>, vector<8x15xf32> -> vector<8x16xf32>
    %cst_39 = arith.constant 0.000000e+00 : f32
    %54 = vector.broadcast %cst_39 : f32 to vector<8x1xf32>
    %55 = vector.extract_strided_slice %49 {offsets = [0, 1], sizes = [8, 15], strides = [1, 1]} : vector<8x16xf32> to vector<8x15xf32>
    %56 = tpu.concatenate %55, %54 in 1 : vector<8x15xf32>, vector<8x1xf32> -> vector<8x16xf32>
    %57 = arith.subf %53, %56 : vector<8x16xf32>
    %cst_40 = arith.constant 0.000000e+00 : f32
    %58 = vector.broadcast %cst_40 : f32 to vector<8x1xf32>
    %59 = vector.extract_strided_slice %50 {offsets = [0, 0], sizes = [8, 15], strides = [1, 1]} : vector<8x16xf32> to vector<8x15xf32>
    %60 = tpu.concatenate %58, %59 in 1 : vector<8x1xf32>, vector<8x15xf32> -> vector<8x16xf32>
    %cst_41 = arith.constant 2.000000e+00 : f32
    %61 = vector.broadcast %cst_41 : f32 to vector<8x16xf32>
    %62 = arith.mulf %61, %50 : vector<8x16xf32>
    %63 = arith.addf %60, %62 : vector<8x16xf32>
    %cst_42 = arith.constant 0.000000e+00 : f32
    %64 = vector.broadcast %cst_42 : f32 to vector<8x1xf32>
    %65 = vector.extract_strided_slice %50 {offsets = [0, 1], sizes = [8, 15], strides = [1, 1]} : vector<8x16xf32> to vector<8x15xf32>
    %66 = tpu.concatenate %65, %64 in 1 : vector<8x15xf32>, vector<8x1xf32> -> vector<8x16xf32>
    %67 = arith.addf %63, %66 : vector<8x16xf32>
    %c0_43 = arith.constant 0 : index
    %c0_44 = arith.constant 0 : index
    %c0_45 = arith.constant 0 : index
    %c0_46 = arith.constant 0 : index
    %68 = vector.load %arg5[%c0_43, %c0_44, %c0_45, %c0_46] : memref<1x2x8x16xf32, #tpu.memory_space<vmem>>, vector<1x1x8x16xf32>
    %69 = vector.shape_cast %68 : vector<1x1x8x16xf32> to vector<8x16xf32>
    %70 = vector.shape_cast %57 : vector<8x16xf32> to vector<1x1x8x16xf32>
    tpu.vector_store %arg5[%c0_43, %c0_44, %c0_45, %c0_46], %70 {strides = array<i32>} : memref<1x2x8x16xf32, #tpu.memory_space<vmem>>, vector<1x1x8x16xf32>,
    %c0_47 = arith.constant 0 : index
    %c1_48 = arith.constant 1 : index
    %c0_49 = arith.constant 0 : index
    %c0_50 = arith.constant 0 : index
    %71 = vector.load %arg5[%c0_47, %c1_48, %c0_49, %c0_50] : memref<1x2x8x16xf32, #tpu.memory_space<vmem>>, vector<1x1x8x16xf32>
    %72 = vector.shape_cast %71 : vector<1x1x8x16xf32> to vector<8x16xf32>
    %73 = vector.shape_cast %67 : vector<8x16xf32> to vector<1x1x8x16xf32>
    tpu.vector_store %arg5[%c0_47, %c1_48, %c0_49, %c0_50], %73 {strides = array<i32>} : memref<1x2x8x16xf32, #tpu.memory_space<vmem>>, vector<1x1x8x16xf32>,
    return
  }
  func.func @transform_0(%arg0: i32, %arg1: i32) -> (i32, i32, i32, i32) {
    %c0_i32 = arith.constant 0 : i32
    %c0_i32_0 = arith.constant 0 : i32
    %c0_i32_1 = arith.constant 0 : i32
    return %arg0, %c0_i32, %arg1, %c0_i32_0 : i32, i32, i32, i32
  }
  func.func @transform_1(%arg0: i32, %arg1: i32) -> (i32, i32, i32, i32) {
    %c1_i32 = arith.constant 1 : i32
    %0 = arith.muli %arg1, %c1_i32 : i32
    %c1_i32_0 = arith.constant 1 : i32
    %1 = arith.subi %0, %c1_i32_0 : i32
    %c0_i32 = arith.constant 0 : i32
    %2 = arith.maxsi %1, %c0_i32 : i32
    %c0_i32_1 = arith.constant 0 : i32
    %c0_i32_2 = arith.constant 0 : i32
    %c0_i32_3 = arith.constant 0 : i32
    return %arg0, %c0_i32_1, %2, %c0_i32_2 : i32, i32, i32, i32
  }
  func.func @transform_2(%arg0: i32, %arg1: i32) -> (i32, i32, i32, i32) {
    %c1_i32 = arith.constant 1 : i32
    %0 = arith.addi %arg1, %c1_i32 : i32
    %c1_i32_0 = arith.constant 1 : i32
    %1 = arith.muli %0, %c1_i32_0 : i32
    %c1_i32_1 = arith.constant 1 : i32
    %2 = arith.minsi %1, %c1_i32_1 : i32
    %c0_i32 = arith.constant 0 : i32
    %c0_i32_2 = arith.constant 0 : i32
    %c0_i32_3 = arith.constant 0 : i32
    return %arg0, %c0_i32, %2, %c0_i32_2 : i32, i32, i32, i32
  }
  func.func @transform_3(%arg0: i32, %arg1: i32) -> (i32, i32, i32, i32) {
    %c0_i32 = arith.constant 0 : i32
    %c0_i32_0 = arith.constant 0 : i32
    %c0_i32_1 = arith.constant 0 : i32
    return %arg0, %c0_i32, %arg1, %c0_i32_0 : i32, i32, i32, i32
  }
}

</mosaic_0001>

<llo_original>
// kernel: tpu_custom_call.1
$region0: #{tpu_custom_call.1}
  #allocation0 [shape = 'u32[]', space=smem, size = 0x4, offset = 0x4, fixed_abs, tag = 'smem constant byte address 0x4 - core index']
  #allocation1 [shape = 'u32[144,128]{1,0:T(1,128)}', space=vmem, size = 0x12000, scoped, tag = 'internal scratch']
  %s0 = inlined_call_operand.hbm [shape: f32[2,3,16,16], index: 0, kind: input, shape index: {}]
  %s1 = inlined_call_operand.hbm [shape: f32[2,3,16,16], index: 1, kind: input, shape index: {}]
  %s2 = inlined_call_operand.hbm [shape: f32[2,3,16,16], index: 2, kind: input, shape index: {}]
  %s3 = inlined_call_operand.hbm [shape: f32[2,2,16,16], index: 3, kind: output, shape index: {}]
  %s4 = sld [smem:[#allocation0]]
  $region57: #{tpu_custom_call.1} parent=0
    _
  %s6 = ssub.s32 1, %s4
  %s7 = scalar_select 0, %s6, %s4
  $region1: #{tpu_custom_call.1} parent=0
    #allocation2 [shape = 'u8[24576]{0}', space=vmem, size = 0x6000, scoped, tag = 'input window, operand 0']
    #allocation3 [shape = 's32[2]{0}', space=sflag, size = 0x8, scoped, tag = 'scoped memory for tpu_custom_call.1']
    #allocation4 [shape = 's32[2]{0}', space=sflag, size = 0x8, scoped, tag = 'scoped memory for tpu_custom_call.1']
    #allocation5 [shape = 'u8[24576]{0}', space=vmem, size = 0x6000, scoped, tag = 'input window, operand 1']
    #allocation6 [shape = 's32[2]{0}', space=sflag, size = 0x8, scoped, tag = 'scoped memory for tpu_custom_call.1']
    #allocation7 [shape = 'u8[24576]{0}', space=vmem, size = 0x6000, scoped, tag = 'input window, operand 2']
    #allocation8 [shape = 'u8[16384]{0}', space=vmem, size = 0x4000, scoped, tag = 'output window, operand 0']
    %8 = vsyncpa [#allocation3], 0
    %s9 = scalar_lea.sflag [#allocation3], 1
    %10 = vsyncpa %s9, 0
    %11 = vsyncpa [#allocation6], 0
    %s12 = scalar_lea.sflag [#allocation6], 1
    %13 = vsyncpa %s12, 0
    %14 = vsyncpa [#allocation4], 0
    %s15 = scalar_lea.sflag [#allocation4], 1
    %16 = vsyncpa %s15, 0
    loop: start=0, step=1, limit=6
    $region2: #{tpu_custom_call.1} parent=1 // loop_pre_header
      _
    $region3: #{tpu_custom_call.1} parent=1 // loop_header
      %s18 = sphi 0, %s22
      %p19 = scmp.ge.s32.totalorder %s18, 6
      %s25 = sphi 0, %s37
      %s26 = sphi 0, %s33
      %s27 = sphi 0, %s25
      %s28 = sphi 0, %s26
      %s29 = sphi 0, %s27
      %s30 = sphi 0, %s28
      %s42 = sphi 0, %s44
      %s45 = sphi 0, %s42
      %s46 = sphi 0, %s45
      %s62 = sphi 0, %s46
      %s76 = sphi 0, %s78
      %s79 = sphi 0, %s76
      %s80 = sphi 0, %s79
      %s96 = sphi 0, %s80
      %s110 = sphi 0, %s112
      %s113 = sphi 0, %s110
      %s114 = sphi 0, %s113
      %s130 = sphi 0, %s114
      %s138 = sphi 0, %s140
      %s141 = sphi 0, %s138
      %s142 = sphi 0, %s141
      %s158 = sphi 0, %s142
    $region4: #{tpu_custom_call.1} parent=1 // loop_header_branch
      %21 = sbr.rel (%p19) target = $region8
    $region5: #{tpu_custom_call.1} parent=1 // loop_body
      %s23 = ssub.s32 %s18, 1
      %s24 = ssub.s32 %s18, 2
      %s31 = sadd.s32 1, %s26
      %p32 = scmp.ge.s32.totalorder %s31, 2
      %s33 = scalar_select %p32, 0, %s31
      %s34 = sadd.s32 1, %s25
      %s35 = scalar_select %p32, %s34, %s25
      %p36 = scmp.ge.s32.totalorder %s35, 2
      %s37 = scalar_select %p36, 0, %s35
      %s38 = ssub.s32 %s25, %s37
      %s39 = ssub.s32 %s26, %s33
      %s40 = sor.u32 %s38, %s39
      %p41 = scmp.eq.s32.totalorder %s40, 0
      %s43 = sadd.s32 %s42, 1
      %s44 = scalar_select %p41, %s42, %s43
      %p47 = pneg %p41
      %p48 = scmp.eq.s32.totalorder %s18, 3
      %p49 = por %p47, %p48
      %p50 = scmp.ne.s32.totalorder %s42, %s45
      %p51 = scmp.eq.s32.totalorder %s18, 0
      %p52 = por %p50, %p51
      %p53 = scmp.ne.s32.totalorder %s42, %s45
      %p54 = scmp.eq.s32.totalorder %s23, 3
      %p55 = por %p53, %p54
      %p56 = scmp.ne.s32.totalorder %s45, %s46
      %p57 = scmp.eq.s32.totalorder %s23, 0
      %p58 = por %p56, %p57
      %p59 = scmp.ne.s32.totalorder %s45, %s46
      %p60 = scmp.eq.s32.totalorder %s24, 3
      %p61 = por %p59, %p60
      %p63 = scmp.ne.s32.totalorder %s46, %s62
      %p64 = scmp.eq.s32.totalorder %s24, 0
      %p65 = por %p63, %p64
      %s66 = ssub.s32 %s26, 1
      %p67 = scmp.gt.s32.totalorder %s66, 0
      %s68 = scalar_select %p67, %s66, 0
      %s69 = ssub.s32 %s33, 1
      %p70 = scmp.gt.s32.totalorder %s69, 0
      %s71 = scalar_select %p70, %s69, 0
      %s72 = ssub.s32 %s25, %s37
      %s73 = ssub.s32 %s68, %s71
      %s74 = sor.u32 %s72, %s73
      %p75 = scmp.eq.s32.totalorder %s74, 0
      %s77 = sadd.s32 %s76, 1
      %s78 = scalar_select %p75, %s76, %s77
      %p81 = pneg %p75
      %p82 = scmp.eq.s32.totalorder %s18, 3
      %p83 = por %p81, %p82
      %p84 = scmp.ne.s32.totalorder %s76, %s79
      %p85 = scmp.eq.s32.totalorder %s18, 0
      %p86 = por %p84, %p85
      %p87 = scmp.ne.s32.totalorder %s76, %s79
      %p88 = scmp.eq.s32.totalorder %s23, 3
      %p89 = por %p87, %p88
      %p90 = scmp.ne.s32.totalorder %s79, %s80
      %p91 = scmp.eq.s32.totalorder %s23, 0
      %p92 = por %p90, %p91
      %p93 = scmp.ne.s32.totalorder %s79, %s80
      %p94 = scmp.eq.s32.totalorder %s24, 3
      %p95 = por %p93, %p94
      %p97 = scmp.ne.s32.totalorder %s80, %s96
      %p98 = scmp.eq.s32.totalorder %s24, 0
      %p99 = por %p97, %p98
      %s100 = sadd.s32 %s26, 1
      %p101 = scmp.lt.s32.totalorder %s100, 1
      %s102 = scalar_select %p101, %s100, 1
      %s103 = sadd.s32 %s33, 1
      %p104 = scmp.lt.s32.totalorder %s103, 1
      %s105 = scalar_select %p104, %s103, 1
      %s106 = ssub.s32 %s25, %s37
      %s107 = ssub.s32 %s102, %s105
      %s108 = sor.u32 %s106, %s107
      %p109 = scmp.eq.s32.totalorder %s108, 0
      %s111 = sadd.s32 %s110, 1
      %s112 = scalar_select %p109, %s110, %s111
      %p115 = pneg %p109
      %p116 = scmp.eq.s32.totalorder %s18, 3
      %p117 = por %p115, %p116
      %p118 = scmp.ne.s32.totalorder %s110, %s113
      %p119 = scmp.eq.s32.totalorder %s18, 0
      %p120 = por %p118, %p119
      %p121 = scmp.ne.s32.totalorder %s110, %s113
      %p122 = scmp.eq.s32.totalorder %s23, 3
      %p123 = por %p121, %p122
      %p124 = scmp.ne.s32.totalorder %s113, %s114
      %p125 = scmp.eq.s32.totalorder %s23, 0
      %p126 = por %p124, %p125
      %p127 = scmp.ne.s32.totalorder %s113, %s114
      %p128 = scmp.eq.s32.totalorder %s24, 3
      %p129 = por %p127, %p128
      %p131 = scmp.ne.s32.totalorder %s114, %s130
      %p132 = scmp.eq.s32.totalorder %s24, 0
      %p133 = por %p131, %p132
      %s134 = ssub.s32 %s25, %s37
      %s135 = ssub.s32 %s26, %s33
      %s136 = sor.u32 %s134, %s135
      %p137 = scmp.eq.s32.totalorder %s136, 0
      %s139 = sadd.s32 %s138, 1
      %s140 = scalar_select %p137, %s138, %s139
      %p143 = pneg %p137
      %p144 = scmp.eq.s32.totalorder %s18, 3
      %p145 = por %p143, %p144
      %p146 = scmp.ne.s32.totalorder %s138, %s141
      %p147 = scmp.eq.s32.totalorder %s18, 0
      %p148 = por %p146, %p147
      %p149 = scmp.ne.s32.totalorder %s138, %s141
      %p150 = scmp.eq.s32.totalorder %s23, 3
      %p151 = por %p149, %p150
      %p152 = scmp.ne.s32.totalorder %s141, %s142
      %p153 = scmp.eq.s32.totalorder %s23, 0
      %p154 = por %p152, %p153
      %p155 = scmp.ne.s32.totalorder %s141, %s142
      %p156 = scmp.eq.s32.totalorder %s24, 3
      %p157 = por %p155, %p156
      %p159 = scmp.ne.s32.totalorder %s142, %s158
      %p160 = scmp.eq.s32.totalorder %s24, 0
      %p161 = por %p159, %p160
      %p162 = scmp.le.s32.totalorder 1, %s18
      %p163 = scmp.lt.s32.totalorder %s18, 5
      %p164 = pnand %p162, %p163
      %p165 = pneg %p164
      // Predicated region
      $region9: #{tpu_custom_call.1} parent=5 // pred_check
        _
      $region10: #{tpu_custom_call.1} parent=5 // pred_check_branch
        %167 = sbr.rel (%p164) target = $region12
      $region11: #{tpu_custom_call.1} parent=5 // pred_region
        %s168 = ssub.s32 %s18, 1
      $region12: #{tpu_custom_call.1} parent=5 // pred_fallthru
        _
      %p169 = scmp.lt.s32.totalorder %s18, 4
      // Predicated region
      $region13: #{tpu_custom_call.1} parent=5 // pred_check
        %p170 = pneg %p169
      $region14: #{tpu_custom_call.1} parent=5 // pred_check_branch
        %172 = sbr.rel (%p170) target = $region16
      $region15: #{tpu_custom_call.1} parent=5 // pred_region
        // Predicated region
        $region17: #{tpu_custom_call.1} parent=15 // pred_check
          %p173 = pneg %p52
        $region18: #{tpu_custom_call.1} parent=15 // pred_check_branch
          %175 = sbr.rel (%p173) target = $region20
        $region19: #{tpu_custom_call.1} parent=15 // pred_region
          %s176 = sand.u32 %s42, 1
          %s177 = scalar_lea.sflag [#allocation3], %s176
          %s178 = sand.u32 %s42, 1
          %s179 = smul.addr %s178, 24
          %s180 = scalar_lea.vmem [#allocation2], %s179
          %s182 = ssub.s32 384, 384
          %183 = vsyncadd %s177, %s182
          %s184 = smul.addr %s25, 6
          %s185 = sadd.s32 %s26, %s184
          %s186 = smul.addr %s185, 128
          %s187 = scalar_lea.hbm %s0, %s186
          %s188 = sshll.u32 %s180, 4
          %s189 = int_to_ptr.vmem [resolvable:$true] %s188
          %194 = dma.hbm_to_vmem [thread:$0]  %s187, 384, %s189, %s177, 256, 128, 8
        $region20: #{tpu_custom_call.1} parent=15 // pred_fallthru
          _
        // Predicated region
        $region21: #{tpu_custom_call.1} parent=15 // pred_check
          %p195 = pneg %p86
        $region22: #{tpu_custom_call.1} parent=15 // pred_check_branch
          %197 = sbr.rel (%p195) target = $region24
        $region23: #{tpu_custom_call.1} parent=15 // pred_region
          %s198 = sand.u32 %s18, 1
          %s199 = scalar_lea.sflag [#allocation6], %s198
          %s200 = sand.u32 %s76, 1
          %s201 = smul.addr %s200, 24
          %s202 = scalar_lea.vmem [#allocation5], %s201
          %s203 = ssub.s32 %s26, 1
          %p204 = scmp.gt.s32.totalorder %s203, 0
          %s205 = scalar_select %p204, %s203, 0
          %s207 = ssub.s32 384, 384
          %208 = vsyncadd %s199, %s207
          %s209 = smul.addr %s25, 6
          %s210 = sadd.s32 %s205, %s209
          %s211 = smul.addr %s210, 128
          %s212 = scalar_lea.hbm %s1, %s211
          %s213 = sshll.u32 %s202, 4
          %s214 = int_to_ptr.vmem [resolvable:$true] %s213
          %219 = dma.hbm_to_vmem [thread:$0]  %s212, 384, %s214, %s199, 256, 128, 8
        $region24: #{tpu_custom_call.1} parent=15 // pred_fallthru
          _
        // Predicated region
        $region25: #{tpu_custom_call.1} parent=15 // pred_check
          %p220 = pneg %p120
        $region26: #{tpu_custom_call.1} parent=15 // pred_check_branch
          %222 = sbr.rel (%p220) target = $region28
        $region27: #{tpu_custom_call.1} parent=15 // pred_region
          %s223 = sand.u32 %s18, 1
          %s224 = scalar_lea.sflag [#allocation6], %s223
          %s225 = sand.u32 %s110, 1
          %s226 = smul.addr %s225, 24
          %s227 = scalar_lea.vmem [#allocation7], %s226
          %s228 = sadd.s32 %s26, 1
          %p229 = scmp.lt.s32.totalorder %s228, 1
          %s230 = scalar_select %p229, %s228, 1
          %s232 = ssub.s32 384, 384
          %233 = vsyncadd %s224, %s232
          %s234 = smul.addr %s25, 6
          %s235 = sadd.s32 %s230, %s234
          %s236 = smul.addr %s235, 128
          %s237 = scalar_lea.hbm %s2, %s236
          %s238 = sshll.u32 %s227, 4
          %s239 = int_to_ptr.vmem [resolvable:$true] %s238
          %244 = dma.hbm_to_vmem [thread:$0]  %s237, 384, %s239, %s224, 256, 128, 8
        $region28: #{tpu_custom_call.1} parent=15 // pred_fallthru
          _
      $region16: #{tpu_custom_call.1} parent=5 // pred_fallthru
        _
      %p245 = scmp.le.s32.totalorder 1, %s18
      %p246 = scmp.lt.s32.totalorder %s18, 5
      %p247 = pnand %p245, %p246
      %p248 = pneg %p247
      // Predicated region
      $region29: #{tpu_custom_call.1} parent=5 // pred_check
        _
      $region30: #{tpu_custom_call.1} parent=5 // pred_check_branch
        %250 = sbr.rel (%p247) target = $region32
      $region31: #{tpu_custom_call.1} parent=5 // pred_region
        %s251 = ssub.s32 %s18, 1
        %s252 = sand.u32 %s45, 1
        %s253 = scalar_lea.sflag [#allocation3], %s252
        %s254 = sand.u32 %s45, 1
        %s255 = smul.addr %s254, 24
        %s256 = scalar_lea.vmem [#allocation2], %s255
        // Predicated region
        $region33: #{tpu_custom_call.1} parent=31 // pred_check
          %p257 = pneg %p58
        $region34: #{tpu_custom_call.1} parent=31 // pred_check_branch
          %259 = sbr.rel (%p257) target = $region36
        $region35: #{tpu_custom_call.1} parent=31 // pred_region
          %260 = dma.done %s253, 384
        $region36: #{tpu_custom_call.1} parent=31 // pred_fallthru
          _
        %s261 = sand.u32 %s23, 1
        %s262 = scalar_lea.sflag [#allocation6], %s261
        %s263 = sand.u32 %s79, 1
        %s264 = smul.addr %s263, 24
        %s265 = scalar_lea.vmem [#allocation5], %s264
        // Predicated region
        $region37: #{tpu_custom_call.1} parent=31 // pred_check
          %p266 = pneg %p92
        $region38: #{tpu_custom_call.1} parent=31 // pred_check_branch
          %268 = sbr.rel (%p266) target = $region40
        $region39: #{tpu_custom_call.1} parent=31 // pred_region
          %269 = dma.done %s262, 384
        $region40: #{tpu_custom_call.1} parent=31 // pred_fallthru
          _
        %s270 = sand.u32 %s23, 1
        %s271 = scalar_lea.sflag [#allocation6], %s270
        %s272 = sand.u32 %s113, 1
        %s273 = smul.addr %s272, 24
        %s274 = scalar_lea.vmem [#allocation7], %s273
        // Predicated region
        $region41: #{tpu_custom_call.1} parent=31 // pred_check
          %p275 = pneg %p126
        $region42: #{tpu_custom_call.1} parent=31 // pred_check_branch
          %277 = sbr.rel (%p275) target = $region44
        $region43: #{tpu_custom_call.1} parent=31 // pred_region
          %278 = dma.done %s271, 384
        $region44: #{tpu_custom_call.1} parent=31 // pred_fallthru
          _
        %s279 = sand.u32 %s45, 1
        %s280 = scalar_lea.sflag [#allocation3], %s279
        %s281 = sand.u32 %s45, 1
        %s282 = smul.addr %s281, 24
        %s283 = scalar_lea.vmem [#allocation2], %s282
        %p284 = pneg %p58
        %p285 = pneg %p55
        %s286 = sand.u32 %s23, 1
        %s287 = scalar_lea.sflag [#allocation6], %s286
        %s288 = sand.u32 %s79, 1
        %s289 = smul.addr %s288, 24
        %s290 = scalar_lea.vmem [#allocation5], %s289
        %p291 = pneg %p92
        %p292 = pneg %p89
        %s293 = sand.u32 %s23, 1
        %s294 = scalar_lea.sflag [#allocation6], %s293
        %s295 = sand.u32 %s113, 1
        %s296 = smul.addr %s295, 24
        %s297 = scalar_lea.vmem [#allocation7], %s296
        %p298 = pneg %p126
        %p299 = pneg %p123
        %p300 = pneg %p154
        %p301 = pneg %p151
        %s302 = sand.u32 %s141, 1
        %s303 = scalar_lea.sflag [#allocation4], %s302
        %s304 = sand.u32 %s141, 1
        %s305 = smul.addr %s304, 16
        %s306 = scalar_lea.vmem [#allocation8], %s305
        %s307 = ssub.s32 %s28, 1
        %p308 = scmp.gt.s32.totalorder %s307, 0
        %s309 = scalar_select %p308, %s307, 0
        %s310 = sadd.s32 %s28, 1
        %p311 = scmp.lt.s32.totalorder %s310, 1
        %s312 = scalar_select %p311, %s310, 1
        %v313 = vld [vmem:[%s256] sm:$0xff]
        %s314 = scalar_lea.vmem %s256, 8 [#allocation2]
        %v315 = vld [vmem:[%s314] sm:$0xff]
        %v316 = vadd.f32 %v313, %v315
        %s317 = scalar_lea.vmem %s256, 16 [#allocation2]
        %v318 = vld [vmem:[%s317] sm:$0xff]
        %v319 = vadd.f32 %v316, %v318
        %v320 = vmul.f32 %v319, 0.33333334
        %p321 = scmp.eq.s32.totalorder %s28, 0
        %v322 = vld [vmem:[%s265] sm:$0xff]
        %s323 = scalar_lea.vmem %s265, 8 [#allocation5]
        %v324 = vld [vmem:[%s323] sm:$0xff]
        %s325 = scalar_lea.vmem %s265, 16 [#allocation5]
        %v326 = vld [vmem:[%s325] sm:$0xff]
        %v327 = vadd.f32 %v322, %v324
        %v328 = vadd.f32 %v327, %v326
        %v329 = vmul.f32 %v328, 0.33333334
        %s330 = scalar_select %p321, 1, 0
        %v331 = vstv %s330
        %vm332 = vcmp.eq.s32.totalorder %v331, 1
        %v333 = vsel %vm332, 0.0, %v329
        %p334 = scmp.eq.s32.totalorder %s28, 1
        %v335 = vld [vmem:[%s274] sm:$0xff]
        %s336 = scalar_lea.vmem %s274, 8 [#allocation7]
        %v337 = vld [vmem:[%s336] sm:$0xff]
        %s338 = scalar_lea.vmem %s274, 16 [#allocation7]
        %v339 = vld [vmem:[%s338] sm:$0xff]
        %v340 = vadd.f32 %v335, %v337
        %v341 = vadd.f32 %v340, %v339
        %v342 = vmul.f32 %v341, 0.33333334
        %s343 = scalar_select %p334, 1, 0
        %v344 = vstv %s343
        %vm345 = vcmp.eq.s32.totalorder %v344, 1
        %v346 = vsel %vm345, 0.0, %v342
        %v348 = vrot.slane %v333, 7
        %v351 = vrot.slane %v320, 7
        %vm353 = vcmask 1040384
        %v354 = vsel %vm353, %v348, %v351
        %v355 = vrot.slane %v320, 1
        %v358 = vrot.slane %v346, 1
        %vm360 = vcmask 1046528
        %v361 = vsel %vm360, %v355, %v358
        %v362 = vmul.f32 %v320, 2.0
        %v363 = vadd.f32 %v354, %v362
        %v364 = vadd.f32 %v363, %v361
        %v365 = vsub.f32 %v354, %v361
        %367 = vrot.lane.b32.xlu0 %v364, 1
        %v368 = vpop.permute.xlu0 %367
        %vm370 = vcmask 7168
        %v371 = vsel %vm370, 0.0, %v368
        %372 = vrot.lane.b32.xlu0 %v364, 127
        %v373 = vpop.permute.xlu0 %372
        %vm375 = vcmask 121856
        %v376 = vsel %vm375, %v373, 0.0
        %v377 = vsub.f32 %v371, %v376
        %379 = vrot.lane.b32.xlu0 %v365, 1
        %v380 = vpop.permute.xlu0 %379
        %v382 = vsel %vm370, 0.0, %v380
        %v383 = vmul.f32 %v365, 2.0
        %v384 = vadd.f32 %v382, %v383
        %385 = vrot.lane.b32.xlu0 %v365, 127
        %v386 = vpop.permute.xlu0 %385
        %v388 = vsel %vm375, %v386, 0.0
        %v389 = vadd.f32 %v384, %v388
        %vm390 = vcmask 130048
        %391 = vst.msk [vmem:[%s306] sm:$0xff] %vm390, %v377
        %s392 = scalar_lea.vmem %s306, 8 [#allocation8]
        %393 = vst.msk [vmem:[%s392] sm:$0xff] %vm390, %v389
        %s394 = sand.u32 %s141, 1
        %s395 = scalar_lea.sflag [#allocation4], %s394
        %s396 = sand.u32 %s141, 1
        %s397 = smul.addr %s396, 16
        %s398 = scalar_lea.vmem [#allocation8], %s397
        // Predicated region
        $region45: #{tpu_custom_call.1} parent=31 // pred_check
          %p399 = pneg %p151
        $region46: #{tpu_custom_call.1} parent=31 // pred_check_branch
          %401 = sbr.rel (%p399) target = $region48
        $region47: #{tpu_custom_call.1} parent=31 // pred_region
          %s403 = ssub.s32 256, 256
          %404 = vsyncadd %s395, %s403
          %s405 = smul.addr %s27, 4
          %s406 = sadd.s32 %s28, %s405
          %s407 = smul.addr %s406, 128
          %s408 = scalar_lea.hbm %s3, %s407
          %s409 = sshll.u32 %s398, 4
          %s410 = int_to_ptr.vmem [resolvable:$true] %s409
          %415 = dma.vmem_to_hbm [thread:$0]  %s410, 256, %s408, %s395, 128, 256, 8
        $region48: #{tpu_custom_call.1} parent=31 // pred_fallthru
          _
      $region32: #{tpu_custom_call.1} parent=5 // pred_fallthru
        _
      %p416 = scmp.le.s32.totalorder 2, %s18
      // Predicated region
      $region49: #{tpu_custom_call.1} parent=5 // pred_check
        %p417 = pneg %p416
      $region50: #{tpu_custom_call.1} parent=5 // pred_check_branch
        %419 = sbr.rel (%p417) target = $region52
      $region51: #{tpu_custom_call.1} parent=5 // pred_region
        %s420 = ssub.s32 %s18, 2
        // Predicated region
        $region53: #{tpu_custom_call.1} parent=51 // pred_check
          %p421 = pneg %p157
        $region54: #{tpu_custom_call.1} parent=51 // pred_check_branch
          %423 = sbr.rel (%p421) target = $region56
        $region55: #{tpu_custom_call.1} parent=51 // pred_region
          %s424 = sand.u32 %s142, 1
          %s425 = scalar_lea.sflag [#allocation4], %s424
          %s426 = sand.u32 %s142, 1
          %s427 = smul.addr %s426, 16
          %s428 = scalar_lea.vmem [#allocation8], %s427
          %429 = dma.done %s425, 256
        $region56: #{tpu_custom_call.1} parent=51 // pred_fallthru
          _
      $region52: #{tpu_custom_call.1} parent=5 // pred_fallthru
        _
    $region6: #{tpu_custom_call.1} parent=1 // loop_footer
      %s22 = sadd.s32 1, %s18
    $region7: #{tpu_custom_call.1} parent=1 // loop_footer_branch
      %17 = sbr.rel target = $region3
    $region8: #{tpu_custom_call.1} parent=1 // loop_exit
      _
    %430 = vsyncpa [#allocation3], 1
    %s431 = scalar_lea.sflag [#allocation3], 1
    %432 = vsyncpa %s431, 1
    %433 = vsyncpa [#allocation6], 1
    %s434 = scalar_lea.sflag [#allocation6], 1
    %435 = vsyncpa %s434, 1
    %436 = vsyncpa [#allocation4], 1
    %s437 = scalar_lea.sflag [#allocation4], 1
    %438 = vsyncpa %s437, 1

</llo_original>
